<compile_context>
chip_gen: v7x
topology: tpu7x:2x2x1
jax: 0.10.0
libtpu: 0.0.40
codegen_flags: <defaults>
</compile_context>

<pallas_src>
import functools

import jax
import jax.numpy as jnp
from jax import lax
from jax.experimental import pallas as pl
from jax.experimental.pallas import tpu as pltpu

_LANE = 128
_MAX_BLOCK_ROWS_F32 = 2048   # (2048, 128) f32 = 1 MiB per input block
_NUM_SPLITS = 2              # leading "parallel" grid axis (2 TCs on v7x)


def _sdsc_kernel(x_ref, y_ref, out_ref, *, alpha, rows_per_split, ragged):
    # x_ref/y_ref: (block_rows, 128) slice of this split; out_ref: (2, 8, 128)
    # resident partial-sum block for this split (index 0 = num, 1 = den).
    i = pl.program_id(1)
    block_rows, lane = x_ref.shape

    @pl.when(i == 0)
    def _():
        out_ref[...] = jnp.zeros_like(out_ref)

    x = x_ref[...].astype(jnp.float32)
    y = y_ref[...].astype(jnp.float32)

    ax = jnp.abs(x)
    ay = jnp.abs(y)
    # sigmoid(z) == 0.5 * (tanh(z/2) + 1): exactly one EUP op per vreg.
    soft_sign = 0.5 * (jnp.tanh((0.5 * alpha) * (x * y)) + 1.0)
    inter = soft_sign * jnp.minimum(ax, ay)
    den = ax + ay

    if ragged:  # static Python bool: only emitted when the last block overhangs
        local_row = lax.broadcasted_iota(jnp.int32, (block_rows, 1), 0)
        keep = (i * block_rows + local_row) < rows_per_split
        inter = jnp.where(keep, inter, 0.0)
        den = jnp.where(keep, den, 0.0)

    # vreg-wise tree reduction (VPU adds of whole (8,128) tiles, no XLU),
    # then one small RMW into the resident output block.
    inter8 = jnp.sum(inter.reshape(block_rows // 8, 8, lane), axis=0)
    den8 = jnp.sum(den.reshape(block_rows // 8, 8, lane), axis=0)
    out_ref[0, :, :] += inter8
    out_ref[1, :, :] += den8


def signal_dice_loss(inputs, targets, *, eps=1e-6, alpha=100.0):
    """1 - SoftSignalDice(inputs, targets). Any matching shapes accepted."""
    assert inputs.shape == targets.shape
    x = inputs.reshape(-1)   # keep native dtype; kernel upcasts per tile
    y = targets.reshape(-1)

    n = x.shape[0]
    lane_pad = (-n) % _LANE
    if lane_pad:
        # Zero padding contributes nothing to either sum.
        x = jnp.pad(x, (0, lane_pad))
        y = jnp.pad(y, (0, lane_pad))
    rows = x.shape[0] // _LANE

    # Pad rows to a multiple of 8 * num_splits (<= 15 extra rows of zeros) so the
    # array reshapes cleanly into per-split, sublane-aligned chunks.
    row_pad = (-rows) % (8 * _NUM_SPLITS)
    if row_pad:
        x = jnp.pad(x, (0, row_pad * _LANE))
        y = jnp.pad(y, (0, row_pad * _LANE))
        rows += row_pad
    rows_per_split = rows // _NUM_SPLITS

    # dtype-aware block sizing: bf16/fp8 stream twice/four times the rows per block
    # for the same 1 MiB VMEM footprint; accumulation stays in f32 in-kernel.
    itemsize = max(1, x.dtype.itemsize)
    max_block_rows = _MAX_BLOCK_ROWS_F32 * max(1, 4 // itemsize)
    block_rows = min(max_block_rows, rows_per_split)   # full-dim or multiple of 8
    inner = pl.cdiv(rows_per_split, block_rows)
    ragged = (inner * block_rows != rows_per_split)

    x3 = x.reshape(_NUM_SPLITS, rows_per_split, _LANE)
    y3 = y.reshape(_NUM_SPLITS, rows_per_split, _LANE)

    kernel = functools.partial(
        _sdsc_kernel,
        alpha=float(alpha),            # Python scalars -> baked-in constants
        rows_per_split=rows_per_split,
        ragged=ragged,
    )

    partials = pl.pallas_call(
        kernel,
        grid=(_NUM_SPLITS, inner),
        in_specs=[
            pl.BlockSpec((None, block_rows, _LANE), lambda c, i: (c, i, 0)),
            pl.BlockSpec((None, block_rows, _LANE), lambda c, i: (c, i, 0)),
        ],
        # Per-split (2,8,128) partial sums; constant block index across the inner
        # (reduction) axis -> stays resident in VMEM as the accumulator.
        out_specs=pl.BlockSpec((None, 2, 8, _LANE), lambda c, i: (c, 0, 0, 0)),
        out_shape=jax.ShapeDtypeStruct((_NUM_SPLITS, 2, 8, _LANE), jnp.float32),
        compiler_params=pltpu.CompilerParams(
            dimension_semantics=("parallel", "arbitrary"),
        ),
    )(x3, y3)

    num = jnp.sum(partials[:, 0])
    den = jnp.sum(partials[:, 1])
    return 1.0 - 2.0 * num / (den + jnp.float32(eps))


def _reference(inputs, targets, eps=1e-6, alpha=100.0):
    x = inputs.astype(jnp.float32)
    y = targets.astype(jnp.float32)
    inter = jnp.sum(jax.nn.sigmoid(alpha * x * y) * jnp.minimum(jnp.abs(x), jnp.abs(y)))
    union = jnp.sum(jnp.abs(x) + jnp.abs(y))
    return 1.0 - 2.0 * inter / (union + eps)


if __name__ == "__main__":
    key = jax.random.PRNGKey(0)
    k1, k2 = jax.random.split(key)
    shape = (2, 4, 16, 16)  # NCHW-style synthetic signal batch
    inputs = jax.random.normal(k1, shape, dtype=jnp.float32)
    targets = jax.random.normal(k2, shape, dtype=jnp.float32)

    loss = jax.jit(signal_dice_loss)(inputs, targets)
    loss = jax.block_until_ready(loss)

    ref = _reference(inputs, targets)
    assert jnp.allclose(loss, ref, rtol=1e-5, atol=1e-5), (loss, ref)
    print("KERNEL_OK")
</pallas_src>

<mosaic_0001>
module attributes {stable_mosaic.version = 11 : i64} {
  func.func @_sdsc_kernel(%arg0: i32, %arg1: i32, %arg2: memref<1x8x128xf32, #tpu.memory_space<vmem>>, %arg3: memref<1x8x128xf32, #tpu.memory_space<vmem>>, %arg4: memref<1x2x8x128xf32, #tpu.memory_space<vmem>>) attributes {dimension_semantics = [#tpu.dimension_semantics<parallel>, #tpu.dimension_semantics<arbitrary>], iteration_bounds = array<i64: 2, 1>, scalar_prefetch = 0 : i64, scratch_operands = 0 : i64, tpu.core_type = #tpu.core_type<tc>, window_params = [{transform_indices = @transform_0, window_bounds = array<i64: 1, 8, 128>}, {transform_indices = @transform_1, window_bounds = array<i64: 1, 8, 128>}, {transform_indices = @transform_2, window_bounds = array<i64: 1, 2, 8, 128>}]} {
    %c0_i32 = arith.constant 0 : i32
    %0 = arith.cmpi eq, %arg1, %c0_i32 : i32
    %1 = arith.extui %0 : i1 to i32
    %c0_i32_0 = arith.constant 0 : i32
    %2 = arith.cmpi ne, %1, %c0_i32_0 : i32
    scf.if %2 {
      %cst_25 = arith.constant 0.000000e+00 : f32
      %36 = vector.broadcast %cst_25 : f32 to vector<2x8x128xf32>
      %c0_26 = arith.constant 0 : index
      %c0_27 = arith.constant 0 : index
      %c0_28 = arith.constant 0 : index
      %c0_29 = arith.constant 0 : index
      %37 = vector.load %arg4[%c0_26, %c0_27, %c0_28, %c0_29] : memref<1x2x8x128xf32, #tpu.memory_space<vmem>>, vector<1x2x8x128xf32>
      %38 = vector.shape_cast %37 : vector<1x2x8x128xf32> to vector<2x8x128xf32>
      %39 = vector.shape_cast %36 : vector<2x8x128xf32> to vector<1x2x8x128xf32>
      tpu.vector_store %arg4[%c0_26, %c0_27, %c0_28, %c0_29], %39 {strides = array<i32>} : memref<1x2x8x128xf32, #tpu.memory_space<vmem>>, vector<1x2x8x128xf32>,
    } else {
    }
    %c0 = arith.constant 0 : index
    %c0_1 = arith.constant 0 : index
    %c0_2 = arith.constant 0 : index
    %3 = vector.load %arg2[%c0, %c0_1, %c0_2] : memref<1x8x128xf32, #tpu.memory_space<vmem>>, vector<1x8x128xf32>
    %4 = vector.shape_cast %3 : vector<1x8x128xf32> to vector<8x128xf32>
    %c0_3 = arith.constant 0 : index
    %c0_4 = arith.constant 0 : index
    %c0_5 = arith.constant 0 : index
    %5 = vector.load %arg3[%c0_3, %c0_4, %c0_5] : memref<1x8x128xf32, #tpu.memory_space<vmem>>, vector<1x8x128xf32>
    %6 = vector.shape_cast %5 : vector<1x8x128xf32> to vector<8x128xf32>
    %7 = math.absf %4 : vector<8x128xf32>
    %8 = math.absf %6 : vector<8x128xf32>
    %9 = arith.mulf %4, %6 : vector<8x128xf32>
    %cst = arith.constant 5.000000e+01 : f32
    %10 = vector.broadcast %cst : f32 to vector<8x128xf32>
    %11 = arith.mulf %10, %9 : vector<8x128xf32>
    %12 = math.tanh %11 : vector<8x128xf32>
    %cst_6 = arith.constant 1.000000e+00 : f32
    %13 = vector.broadcast %cst_6 : f32 to vector<8x128xf32>
    %14 = arith.addf %12, %13 : vector<8x128xf32>
    %cst_7 = arith.constant 5.000000e-01 : f32
    %15 = vector.broadcast %cst_7 : f32 to vector<8x128xf32>
    %16 = arith.mulf %15, %14 : vector<8x128xf32>
    %17 = arith.minimumf %7, %8 : vector<8x128xf32>
    %18 = arith.mulf %16, %17 : vector<8x128xf32>
    %19 = arith.addf %7, %8 : vector<8x128xf32>
    %20 = vector.shape_cast %18 : vector<8x128xf32> to vector<1x8x128xf32>
    %cst_8 = arith.constant dense<0.000000e+00> : vector<8x128xf32>
    %21 = vector.multi_reduction <add>, %20, %cst_8 [0] : vector<1x8x128xf32> to vector<8x128xf32>
    %22 = vector.shape_cast %19 : vector<8x128xf32> to vector<1x8x128xf32>
    %cst_9 = arith.constant dense<0.000000e+00> : vector<8x128xf32>
    %23 = vector.multi_reduction <add>, %22, %cst_9 [0] : vector<1x8x128xf32> to vector<8x128xf32>
    %c0_10 = arith.constant 0 : index
    %c0_11 = arith.constant 0 : index
    %c0_12 = arith.constant 0 : index
    %c0_13 = arith.constant 0 : index
    %24 = vector.load %arg4[%c0_10, %c0_11, %c0_12, %c0_13] : memref<1x2x8x128xf32, #tpu.memory_space<vmem>>, vector<1x1x8x128xf32>
    %25 = vector.shape_cast %24 : vector<1x1x8x128xf32> to vector<8x128xf32>
    %26 = arith.addf %25, %21 : vector<8x128xf32>
    %c0_14 = arith.constant 0 : index
    %c0_15 = arith.constant 0 : index
    %c0_16 = arith.constant 0 : index
    %c0_17 = arith.constant 0 : index
    %27 = vector.load %arg4[%c0_14, %c0_15, %c0_16, %c0_17] : memref<1x2x8x128xf32, #tpu.memory_space<vmem>>, vector<1x1x8x128xf32>
    %28 = vector.shape_cast %27 : vector<1x1x8x128xf32> to vector<8x128xf32>
    %29 = vector.shape_cast %26 : vector<8x128xf32> to vector<1x1x8x128xf32>
    tpu.vector_store %arg4[%c0_14, %c0_15, %c0_16, %c0_17], %29 {strides = array<i32>} : memref<1x2x8x128xf32, #tpu.memory_space<vmem>>, vector<1x1x8x128xf32>,
    %c0_18 = arith.constant 0 : index
    %c1 = arith.constant 1 : index
    %c0_19 = arith.constant 0 : index
    %c0_20 = arith.constant 0 : index
    %30 = vector.load %arg4[%c0_18, %c1, %c0_19, %c0_20] : memref<1x2x8x128xf32, #tpu.memory_space<vmem>>, vector<1x1x8x128xf32>
    %31 = vector.shape_cast %30 : vector<1x1x8x128xf32> to vector<8x128xf32>
    %32 = arith.addf %31, %23 : vector<8x128xf32>
    %c0_21 = arith.constant 0 : index
    %c1_22 = arith.constant 1 : index
    %c0_23 = arith.constant 0 : index
    %c0_24 = arith.constant 0 : index
    %33 = vector.load %arg4[%c0_21, %c1_22, %c0_23, %c0_24] : memref<1x2x8x128xf32, #tpu.memory_space<vmem>>, vector<1x1x8x128xf32>
    %34 = vector.shape_cast %33 : vector<1x1x8x128xf32> to vector<8x128xf32>
    %35 = vector.shape_cast %32 : vector<8x128xf32> to vector<1x1x8x128xf32>
    tpu.vector_store %arg4[%c0_21, %c1_22, %c0_23, %c0_24], %35 {strides = array<i32>} : memref<1x2x8x128xf32, #tpu.memory_space<vmem>>, vector<1x1x8x128xf32>,
    return
  }
  func.func @transform_0(%arg0: i32, %arg1: i32) -> (i32, i32, i32) {
    %c0_i32 = arith.constant 0 : i32
    %c0_i32_0 = arith.constant 0 : i32
    return %arg0, %arg1, %c0_i32 : i32, i32, i32
  }
  func.func @transform_1(%arg0: i32, %arg1: i32) -> (i32, i32, i32) {
    %c0_i32 = arith.constant 0 : i32
    %c0_i32_0 = arith.constant 0 : i32
    return %arg0, %arg1, %c0_i32 : i32, i32, i32
  }
  func.func @transform_2(%arg0: i32, %arg1: i32) -> (i32, i32, i32, i32) {
    %c0_i32 = arith.constant 0 : i32
    %c0_i32_0 = arith.constant 0 : i32
    %c0_i32_1 = arith.constant 0 : i32
    %c0_i32_2 = arith.constant 0 : i32
    return %arg0, %c0_i32, %c0_i32_0, %c0_i32_1 : i32, i32, i32, i32
  }
}

</mosaic_0001>

<llo_original>
// kernel: signal_dice_loss.1
$region0: #{signal_dice_loss.1}
  #allocation0 [shape = 'u32[]', space=smem, size = 0x4, offset = 0x4, fixed_abs, tag = 'smem constant byte address 0x4 - core index']
  #allocation1 [shape = 'u32[144,128]{1,0:T(1,128)}', space=vmem, size = 0x12000, scoped, tag = 'internal scratch']
  %s0 = inlined_call_operand.vmem [shape: f32[2,8,128], index: 0, kind: input, shape index: {}]
  %s1 = inlined_call_operand.vmem [shape: f32[2,8,128], index: 1, kind: input, shape index: {}]
  %s2 = inlined_call_operand.vmem [shape: f32[2,2,8,128], index: 2, kind: output, shape index: {}]
  %s3 = sld [smem:[#allocation0]]
  $region45: #{signal_dice_loss.1} parent=0
    _
  %s5 = ssub.s32 1, %s3
  %s6 = scalar_select 0, %s5, %s3
  loop: start=0, step=1, limit=4
  $region2: #{signal_dice_loss.1} parent=0 // loop_pre_header
    _
  $region3: #{signal_dice_loss.1} parent=0 // loop_header
    %s8 = sphi 0, %s12
    %p9 = scmp.ge.s32.totalorder %s8, 4
    %s15 = sphi 0, %s27
    %s16 = sphi 0, %s23
    %s17 = sphi 0, %s15
    %s18 = sphi 0, %s16
    %s19 = sphi 0, %s17
    %s20 = sphi 0, %s18
    %s32 = sphi 0, %s34
    %s35 = sphi 0, %s32
    %s36 = sphi 0, %s35
    %s52 = sphi 0, %s36
    %s60 = sphi 0, %s62
    %s63 = sphi 0, %s60
    %s64 = sphi 0, %s63
    %s80 = sphi 0, %s64
    %s86 = sphi 0, %s88
    %s89 = sphi 0, %s86
    %s90 = sphi 0, %s89
    %s106 = sphi 0, %s90
  $region4: #{signal_dice_loss.1} parent=0 // loop_header_branch
    %11 = sbr.rel (%p9) target = $region8
  $region5: #{signal_dice_loss.1} parent=0 // loop_body
    %s13 = ssub.s32 %s8, 1
    %s14 = ssub.s32 %s8, 2
    %s21 = sadd.s32 1, %s16
    %p22 = scmp.ge.s32.totalorder %s21, 1
    %s23 = scalar_select %p22, 0, %s21
    %s24 = sadd.s32 1, %s15
    %s25 = scalar_select %p22, %s24, %s15
    %p26 = scmp.ge.s32.totalorder %s25, 2
    %s27 = scalar_select %p26, 0, %s25
    %s28 = ssub.s32 %s15, %s27
    %s29 = ssub.s32 %s16, %s23
    %s30 = sor.u32 %s28, %s29
    %p31 = scmp.eq.s32.totalorder %s30, 0
    %s33 = sadd.s32 %s32, 1
    %s34 = scalar_select %p31, %s32, %s33
    %p37 = pneg %p31
    %p38 = scmp.eq.s32.totalorder %s8, 1
    %p39 = por %p37, %p38
    %p40 = scmp.ne.s32.totalorder %s32, %s35
    %p41 = scmp.eq.s32.totalorder %s8, 0
    %p42 = por %p40, %p41
    %p43 = scmp.ne.s32.totalorder %s32, %s35
    %p44 = scmp.eq.s32.totalorder %s13, 1
    %p45 = por %p43, %p44
    %p46 = scmp.ne.s32.totalorder %s35, %s36
    %p47 = scmp.eq.s32.totalorder %s13, 0
    %p48 = por %p46, %p47
    %p49 = scmp.ne.s32.totalorder %s35, %s36
    %p50 = scmp.eq.s32.totalorder %s14, 1
    %p51 = por %p49, %p50
    %p53 = scmp.ne.s32.totalorder %s36, %s52
    %p54 = scmp.eq.s32.totalorder %s14, 0
    %p55 = por %p53, %p54
    %s56 = ssub.s32 %s15, %s27
    %s57 = ssub.s32 %s16, %s23
    %s58 = sor.u32 %s56, %s57
    %p59 = scmp.eq.s32.totalorder %s58, 0
    %s61 = sadd.s32 %s60, 1
    %s62 = scalar_select %p59, %s60, %s61
    %p65 = pneg %p59
    %p66 = scmp.eq.s32.totalorder %s8, 1
    %p67 = por %p65, %p66
    %p68 = scmp.ne.s32.totalorder %s60, %s63
    %p69 = scmp.eq.s32.totalorder %s8, 0
    %p70 = por %p68, %p69
    %p71 = scmp.ne.s32.totalorder %s60, %s63
    %p72 = scmp.eq.s32.totalorder %s13, 1
    %p73 = por %p71, %p72
    %p74 = scmp.ne.s32.totalorder %s63, %s64
    %p75 = scmp.eq.s32.totalorder %s13, 0
    %p76 = por %p74, %p75
    %p77 = scmp.ne.s32.totalorder %s63, %s64
    %p78 = scmp.eq.s32.totalorder %s14, 1
    %p79 = por %p77, %p78
    %p81 = scmp.ne.s32.totalorder %s64, %s80
    %p82 = scmp.eq.s32.totalorder %s14, 0
    %p83 = por %p81, %p82
    %s84 = ssub.s32 %s15, %s27
    %p85 = scmp.eq.s32.totalorder %s84, 0
    %s87 = sadd.s32 %s86, 1
    %s88 = scalar_select %p85, %s86, %s87
    %p91 = pneg %p85
    %p92 = scmp.eq.s32.totalorder %s8, 1
    %p93 = por %p91, %p92
    %p94 = scmp.ne.s32.totalorder %s86, %s89
    %p95 = scmp.eq.s32.totalorder %s8, 0
    %p96 = por %p94, %p95
    %p97 = scmp.ne.s32.totalorder %s86, %s89
    %p98 = scmp.eq.s32.totalorder %s13, 1
    %p99 = por %p97, %p98
    %p100 = scmp.ne.s32.totalorder %s89, %s90
    %p101 = scmp.eq.s32.totalorder %s13, 0
    %p102 = por %p100, %p101
    %p103 = scmp.ne.s32.totalorder %s89, %s90
    %p104 = scmp.eq.s32.totalorder %s14, 1
    %p105 = por %p103, %p104
    %p107 = scmp.ne.s32.totalorder %s90, %s106
    %p108 = scmp.eq.s32.totalorder %s14, 0
    %p109 = por %p107, %p108
    %p110 = scmp.le.s32.totalorder 1, %s8
    %p111 = scmp.lt.s32.totalorder %s8, 3
    %p112 = pnand %p110, %p111
    %p113 = pneg %p112
    // Predicated region
    $region9: #{signal_dice_loss.1} parent=5 // pred_check
      _
    $region10: #{signal_dice_loss.1} parent=5 // pred_check_branch
      %115 = sbr.rel (%p112) target = $region12
    $region11: #{signal_dice_loss.1} parent=5 // pred_region
      %s116 = ssub.s32 %s8, 1
    $region12: #{signal_dice_loss.1} parent=5 // pred_fallthru
      _
    %p117 = scmp.lt.s32.totalorder %s8, 2
    // Predicated region
    $region13: #{signal_dice_loss.1} parent=5 // pred_check
      %p118 = pneg %p117
    $region14: #{signal_dice_loss.1} parent=5 // pred_check_branch
      %120 = sbr.rel (%p118) target = $region16
    $region15: #{signal_dice_loss.1} parent=5 // pred_region
      // Predicated region
      $region17: #{signal_dice_loss.1} parent=15 // pred_check
        %p121 = pneg %p42
      $region18: #{signal_dice_loss.1} parent=15 // pred_check_branch
        %123 = sbr.rel (%p121) target = $region20
      $region19: #{signal_dice_loss.1} parent=15 // pred_region
        %p124 = scmp.lt.s32.totalorder %s15, 1
        %s125 = scalar_select %p124, %s15, 1
        %p126 = scmp.lt.s32.totalorder %s16, 0
        %s127 = scalar_select %p126, %s16, 0
        %s128 = sadd.s32 %s127, %s125
        %s129 = smul.addr %s128, 8
        %s130 = scalar_lea.vmem %s0, %s129
      $region20: #{signal_dice_loss.1} parent=15 // pred_fallthru
        _
      // Predicated region
      $region21: #{signal_dice_loss.1} parent=15 // pred_check
        %p131 = pneg %p70
      $region22: #{signal_dice_loss.1} parent=15 // pred_check_branch
        %133 = sbr.rel (%p131) target = $region24
      $region23: #{signal_dice_loss.1} parent=15 // pred_region
        %p134 = scmp.lt.s32.totalorder %s15, 1
        %s135 = scalar_select %p134, %s15, 1
        %p136 = scmp.lt.s32.totalorder %s16, 0
        %s137 = scalar_select %p136, %s16, 0
        %s138 = sadd.s32 %s137, %s135
        %s139 = smul.addr %s138, 8
        %s140 = scalar_lea.vmem %s1, %s139
      $region24: #{signal_dice_loss.1} parent=15 // pred_fallthru
        _
    $region16: #{signal_dice_loss.1} parent=5 // pred_fallthru
      _
    %p141 = scmp.le.s32.totalorder 1, %s8
    %p142 = scmp.lt.s32.totalorder %s8, 3
    %p143 = pnand %p141, %p142
    %p144 = pneg %p143
    // Predicated region
    $region25: #{signal_dice_loss.1} parent=5 // pred_check
      _
    $region26: #{signal_dice_loss.1} parent=5 // pred_check_branch
      %146 = sbr.rel (%p143) target = $region28
    $region27: #{signal_dice_loss.1} parent=5 // pred_region
      %s147 = ssub.s32 %s8, 1
      %p148 = scmp.lt.s32.totalorder %s17, 1
      %s149 = scalar_select %p148, %s17, 1
      %p150 = scmp.lt.s32.totalorder %s18, 0
      %s151 = scalar_select %p150, %s18, 0
      %s152 = sadd.s32 %s151, %s149
      %s153 = smul.addr %s152, 8
      %s154 = scalar_lea.vmem %s0, %s153
      %p155 = pneg %p48
      %p156 = pneg %p45
      %p157 = scmp.lt.s32.totalorder %s17, 1
      %s158 = scalar_select %p157, %s17, 1
      %p159 = scmp.lt.s32.totalorder %s18, 0
      %s160 = scalar_select %p159, %s18, 0
      %s161 = sadd.s32 %s160, %s158
      %s162 = smul.addr %s161, 8
      %s163 = scalar_lea.vmem %s1, %s162
      %p164 = pneg %p76
      %p165 = pneg %p73
      %p166 = pneg %p102
      %p167 = pneg %p99
      %p168 = scmp.lt.s32.totalorder %s17, 1
      %s169 = scalar_select %p168, %s17, 1
      %s170 = smul.addr %s169, 2
      %s171 = smul.addr %s170, 8
      %s172 = scalar_lea.vmem %s2, %s171
      %p173 = scmp.lt.s32.totalorder %s17, 1
      %s174 = scalar_select %p173, %s17, 1
      %p175 = scmp.lt.s32.totalorder %s18, 0
      %s176 = scalar_select %p175, %s18, 0
      %s177 = sadd.s32 %s176, %s174
      %s178 = smul.addr %s177, 8
      %s179 = scalar_lea.vmem %s0, %s178
      %p180 = scmp.lt.s32.totalorder %s17, 1
      %s181 = scalar_select %p180, %s17, 1
      %p182 = scmp.lt.s32.totalorder %s18, 0
      %s183 = scalar_select %p182, %s18, 0
      %s184 = sadd.s32 %s183, %s181
      %s185 = smul.addr %s184, 8
      %s186 = scalar_lea.vmem %s1, %s185
      %p187 = scmp.lt.s32.totalorder %s17, 1
      %s188 = scalar_select %p187, %s17, 1
      %s189 = smul.addr %s188, 2
      %s190 = smul.addr %s189, 8
      %s191 = scalar_lea.vmem %s2, %s190
      %p192 = scmp.eq.s32.totalorder %s18, 0
      // Predicated region
      $region29: #{signal_dice_loss.1} parent=27 // pred_check
        %p193 = pneg %p192
      $region30: #{signal_dice_loss.1} parent=27 // pred_check_branch
        %195 = sbr.rel (%p193) target = $region32
      $region31: #{signal_dice_loss.1} parent=27 // pred_region
        %196 = vst [vmem:[%s191] sm:$0xff] 0.0
        %197 = vst [vmem:[%s191 + $0x8] sm:$0xff] 0.0
      $region32: #{signal_dice_loss.1} parent=27 // pred_fallthru
        _
      %v198 = vld [vmem:[%s179] sm:$0xff]
      %v199 = vld [vmem:[%s186] sm:$0xff]
      %v200 = vand.u32 2147483647, %v198
      %v201 = vand.u32 2147483647, %v199
      %v202 = vmul.f32 %v198, %v199
      %v203 = vmul.f32 %v202, 50.0
      %v204 = vtanh.pop %v203
      %v205 = vadd.f32 %v204, 1.0
      %v206 = vmul.f32 %v205, 0.5
      %v207 = vmin.f32 %v200, %v201
      %v208 = vmul.f32 %v206, %v207
      %v209 = vadd.f32 %v200, %v201
      %v210 = vadd.f32 %v208, 0.0
      %v211 = vadd.f32 %v209, 0.0
      %v212 = vld [vmem:[%s191] sm:$0xff]
      %v213 = vadd.f32 %v212, %v210
      %214 = vst [vmem:[%s191] sm:$0xff] %v213
      %s215 = scalar_lea.vmem %s191, 8
      %v216 = vld [vmem:[%s215] sm:$0xff]
      %v217 = vadd.f32 %v216, %v211
      %218 = vst [vmem:[%s215] sm:$0xff] %v217
      %p219 = scmp.lt.s32.totalorder %s17, 1
      %s220 = scalar_select %p219, %s17, 1
      %s221 = smul.addr %s220, 2
      %s222 = smul.addr %s221, 8
      %s223 = scalar_lea.vmem %s2, %s222
      // Predicated region
      $region33: #{signal_dice_loss.1} parent=27 // pred_check
        %p224 = pneg %p99
      $region34: #{signal_dice_loss.1} parent=27 // pred_check_branch
        %226 = sbr.rel (%p224) target = $region36
      $region35: #{signal_dice_loss.1} parent=27 // pred_region
        _
      $region36: #{signal_dice_loss.1} parent=27 // pred_fallthru
        _
    $region28: #{signal_dice_loss.1} parent=5 // pred_fallthru
      _
    %p227 = scmp.le.s32.totalorder 2, %s8
    // Predicated region
    $region37: #{signal_dice_loss.1} parent=5 // pred_check
      %p228 = pneg %p227
    $region38: #{signal_dice_loss.1} parent=5 // pred_check_branch
      %230 = sbr.rel (%p228) target = $region40
    $region39: #{signal_dice_loss.1} parent=5 // pred_region
      %s231 = ssub.s32 %s8, 2
      // Predicated region
      $region41: #{signal_dice_loss.1} parent=39 // pred_check
        %p232 = pneg %p105
      $region42: #{signal_dice_loss.1} parent=39 // pred_check_branch
        %234 = sbr.rel (%p232) target = $region44
      $region43: #{signal_dice_loss.1} parent=39 // pred_region
        %p235 = scmp.lt.s32.totalorder %s19, 1
        %s236 = scalar_select %p235, %s19, 1
        %s237 = smul.addr %s236, 2
        %s238 = smul.addr %s237, 8
        %s239 = scalar_lea.vmem %s2, %s238
      $region44: #{signal_dice_loss.1} parent=39 // pred_fallthru
        _
    $region40: #{signal_dice_loss.1} parent=5 // pred_fallthru
      _
  $region6: #{signal_dice_loss.1} parent=0 // loop_footer
    %s12 = sadd.s32 1, %s8
  $region7: #{signal_dice_loss.1} parent=0 // loop_footer_branch
    %7 = sbr.rel target = $region3
  $region8: #{signal_dice_loss.1} parent=0 // loop_exit
    _

</llo_original>
